<compile_context>
chip_gen: v7x
topology: tpu7x:2x2x1
jax: 0.10.0
libtpu: 0.0.40
codegen_flags: <defaults>
</compile_context>

<pallas_src>
import jax
import jax.numpy as jnp
from jax.experimental import pallas as pl
from jax.experimental.pallas import tpu as pltpu


# ----------------------------------------------------------------------------
# Kernels
# ----------------------------------------------------------------------------
def _len_mask_kernel(x_ref, seg_ref, segt_ref, o_ref):
    """Compute-the-mask path: per-capsule squared lengths via one MXU matmul,
    first-occurrence argmax, one-hot expanded back to flat lanes via a second
    tiny matmul, then a single select."""
    x = x_ref[...]                                    # (tb, N*C), input dtype
    xf = x.astype(jnp.float32)
    xsq = xf * xf

    # Per-capsule squared L2 lengths with the 0/1 segment matrix S (NC, N):
    #   sums[b, n] = sum_c x[b, n*C + c]^2
    # Split xsq into bf16-exact hi/lo parts so the reduction stays accurate to
    # ~2^-18 relative error regardless of how many bf16 passes the compiler
    # uses for f32 MXU operands (protects the argmax tie-break).  Cost: a few
    # VPU passes + one extra tiny matmul, negligible vs. HBM time.
    hi = xsq.astype(jnp.bfloat16).astype(jnp.float32)
    lo = xsq - hi
    seg = seg_ref[...]                                # (NC, N) f32, 0/1
    sums = (jnp.dot(hi, seg, preferred_element_type=jnp.float32) +
            jnp.dot(lo, seg, preferred_element_type=jnp.float32))   # (tb, N)

    # argmax over capsules (sqrt is monotone, so argmax of length == argmax of
    # length^2).  First-occurrence tie-break matches torch.argmax.
    n_caps = sums.shape[-1]
    rowmax = jnp.max(sums, axis=-1, keepdims=True)                   # (tb, 1)
    col = jax.lax.broadcasted_iota(jnp.int32, sums.shape, 1).astype(jnp.float32)
    best = jnp.min(jnp.where(sums == rowmax, col, jnp.float32(n_caps)),
                   axis=-1, keepdims=True)                           # (tb, 1)
    onehot = (col == best).astype(jnp.float32)                       # (tb, N)

    # Expand the one-hot back to flat lanes with one tiny matmul.  Both
    # operands are exactly 0/1 (bf16-exact), so this is exact at any MXU
    # pass configuration.
    keep = jnp.dot(onehot, segt_ref[...],
                   preferred_element_type=jnp.float32)               # (tb, NC)

    # Single select; keeps the original bits of x in its native dtype.
    o_ref[...] = jnp.where(keep > 0.5, x, jnp.zeros_like(x))


def _given_mask_kernel(x_ref, m_ref, segt_ref, o_ref):
    """Explicit-mask path: expand the (tb, N) mask to flat lanes with one tiny
    MXU matmul against the constant (N, NC) segment matrix, then multiply."""
    x = x_ref[...].astype(jnp.float32)                # (tb, NC)
    m = m_ref[...].astype(jnp.float32)                # (tb, N)
    mexp = jnp.dot(m, segt_ref[...],
                   preferred_element_type=jnp.float32)               # (tb, NC)
    o_ref[...] = (x * mexp).astype(o_ref.dtype)


# ----------------------------------------------------------------------------
# Wrapper
# ----------------------------------------------------------------------------
def _round_up(v, m):
    return ((v + m - 1) // m) * m


def _choose_tb(B, sublane):
    """Batch tile: as large as reasonable (per-step overhead amortization),
    multiple of the dtype sublane granule, and >= 2 grid steps when the batch
    allows it so v7x can spread work over both TensorCores."""
    Br = _round_up(B, sublane)
    if Br <= sublane:
        return B                       # tiny batch: one block == full array
    tb = min(1024, Br)                 # ~1K rows: well under v5e/v7x VMEM limits
    if pl.cdiv(B, tb) < 2:
        tb = max(sublane, _round_up(Br // 2, sublane))
    return tb


def _segment_matrices(N, C):
    """Constant 0/1 segment matrices mapping flat lanes <-> capsules."""
    NC = N * C
    cap = jnp.arange(NC, dtype=jnp.int32) // C
    ids = jnp.arange(N, dtype=jnp.int32)
    seg = (cap[:, None] == ids[None, :]).astype(jnp.float32)    # (NC, N)
    segt = (ids[:, None] == cap[None, :]).astype(jnp.float32)   # (N, NC)
    return seg, segt


def mask_forward(x, mask=None):
    """x: (B, N, C). Optional mask: (B, N). Returns (B, N*C) in x.dtype,
    replicating Mask.forward of the PyTorch module."""
    B, N, C = x.shape
    NC = N * C
    xf = x.reshape(B, NC)               # free row-major flatten, dtype preserved
    out_dtype = x.dtype

    sublane = max(8, 32 // jnp.dtype(x.dtype).itemsize)   # 8 for f32, 16 for bf16
    tb = _choose_tb(B, sublane)
    grid = (pl.cdiv(B, tb),)
    seg, segt = _segment_matrices(N, C)

    if mask is None:
        kernel = _len_mask_kernel
        in_specs = [pl.BlockSpec((tb, NC), lambda b: (b, 0)),
                    pl.BlockSpec((NC, N), lambda b: (0, 0)),
                    pl.BlockSpec((N, NC), lambda b: (0, 0))]
        args = (xf, seg, segt)
    else:
        kernel = _given_mask_kernel
        in_specs = [pl.BlockSpec((tb, NC), lambda b: (b, 0)),
                    pl.BlockSpec((tb, N), lambda b: (b, 0)),
                    pl.BlockSpec((N, NC), lambda b: (0, 0))]
        args = (xf, mask, segt)

    return pl.pallas_call(
        kernel,
        out_shape=jax.ShapeDtypeStruct((B, NC), out_dtype),
        grid_spec=pltpu.PrefetchScalarGridSpec(
            num_scalar_prefetch=0,
            grid=grid,
            in_specs=in_specs,
            out_specs=pl.BlockSpec((tb, NC), lambda b: (b, 0)),
        ),
        compiler_params=pltpu.CompilerParams(
            dimension_semantics=("parallel",)),   # batch axis -> both TCs on v7x
    )(*args)


# ----------------------------------------------------------------------------
# Pure-JAX reference (mirrors the PyTorch forward)
# ----------------------------------------------------------------------------
def mask_ref(x, mask=None):
    if mask is None:
        length = jnp.sqrt(jnp.sum(jnp.square(x.astype(jnp.float32)), -1))
        mask = jax.nn.one_hot(jnp.argmax(length, -1), length.shape[1],
                              dtype=x.dtype)
    else:
        mask = mask.astype(x.dtype)
    return (x * mask[..., None]).reshape(x.shape[0], -1)


if __name__ == "__main__":
    key = jax.random.PRNGKey(0)
    N, C = 10, 16
    kx, km, kx2, kx3 = jax.random.split(key, 4)

    # 1) length-derived mask, small f32 batch
    x = jax.random.normal(kx, (2, N, C), jnp.float32)
    out = jax.block_until_ready(mask_forward(x))
    ref = mask_ref(x)
    assert out.shape == (2, N * C) and out.dtype == x.dtype
    assert jnp.allclose(out, ref, atol=1e-6, rtol=1e-6), "mismatch (len-mask path)"

    # 2) explicit mask supplied (the `[x, mask]` list case of the module)
    labels = jax.random.randint(km, (2,), 0, N)
    m = jax.nn.one_hot(labels, N, dtype=jnp.float32)
    out2 = jax.block_until_ready(mask_forward(x, m))
    ref2 = mask_ref(x, m)
    assert jnp.allclose(out2, ref2, atol=1e-6, rtol=1e-6), "mismatch (given-mask path)"

    # 3) batch not divisible by the tile -> cdiv grid with a ragged last block
    x3 = jax.random.normal(kx2, (33, N, C), jnp.float32)
    out3 = jax.block_until_ready(mask_forward(x3))
    ref3 = mask_ref(x3)
    assert jnp.allclose(out3, ref3, atol=1e-6, rtol=1e-6), "mismatch (ragged grid)"

    # 4) bf16 input: dtype preserved end-to-end
    x4 = jax.random.normal(kx3, (16, N, C), jnp.float32).astype(jnp.bfloat16)
    out4 = jax.block_until_ready(mask_forward(x4))
    ref4 = mask_ref(x4)
    assert out4.dtype == jnp.bfloat16
    assert jnp.allclose(out4.astype(jnp.float32), ref4.astype(jnp.float32),
                        atol=1e-6, rtol=1e-6), "mismatch (bf16 path)"

    print("KERNEL_OK")
</pallas_src>

<mosaic_0001>
module attributes {stable_mosaic.version = 11 : i64} {
  func.func @_len_mask_kernel(%arg0: i32, %arg1: memref<2x160xf32, #tpu.memory_space<vmem>>, %arg2: memref<160x10xf32, #tpu.memory_space<vmem>>, %arg3: memref<10x160xf32, #tpu.memory_space<vmem>>, %arg4: memref<2x160xf32, #tpu.memory_space<vmem>>) attributes {dimension_semantics = [#tpu.dimension_semantics<parallel>], iteration_bounds = array<i64: 1>, scalar_prefetch = 0 : i64, scratch_operands = 0 : i64, tpu.core_type = #tpu.core_type<tc>, window_params = [{transform_indices = @transform_0, window_bounds = array<i64: 2, 160>}, {pipeline_mode = #tpu.pipeline_mode<synchronous>, transform_indices = @transform_1, window_bounds = array<i64: 160, 10>}, {pipeline_mode = #tpu.pipeline_mode<synchronous>, transform_indices = @transform_2, window_bounds = array<i64: 10, 160>}, {transform_indices = @transform_3, window_bounds = array<i64: 2, 160>}]} {
    %c0 = arith.constant 0 : index
    %c0_0 = arith.constant 0 : index
    %0 = vector.load %arg1[%c0, %c0_0] : memref<2x160xf32, #tpu.memory_space<vmem>>, vector<2x160xf32>
    %1 = arith.mulf %0, %0 : vector<2x160xf32>
    %2 = arith.truncf %1 : vector<2x160xf32> to vector<2x160xbf16>
    %3 = arith.extf %2 : vector<2x160xbf16> to vector<2x160xf32>
    %4 = arith.subf %1, %3 : vector<2x160xf32>
    %c0_1 = arith.constant 0 : index
    %c0_2 = arith.constant 0 : index
    %5 = vector.load %arg2[%c0_1, %c0_2] : memref<160x10xf32, #tpu.memory_space<vmem>>, vector<160x10xf32>
    %cst = arith.constant dense<0.000000e+00> : vector<2x10xf32>
    %6 = tpu.matmul %3, %5, %cst {dimension_numbers = #tpu.dot_dimension_numbers<[1], [0], [0], [1], [0, 0, 1, 1], [], []>} : vector<2x160xf32>, vector<160x10xf32>, vector<2x10xf32> -> vector<2x10xf32>
    %cst_3 = arith.constant dense<0.000000e+00> : vector<2x10xf32>
    %7 = tpu.matmul %4, %5, %cst_3 {dimension_numbers = #tpu.dot_dimension_numbers<[1], [0], [0], [1], [0, 0, 1, 1], [], []>} : vector<2x160xf32>, vector<160x10xf32>, vector<2x10xf32> -> vector<2x10xf32>
    %8 = arith.addf %6, %7 : vector<2x10xf32>
    %cst_4 = arith.constant dense<0xFF800000> : vector<2xf32>
    %9 = vector.multi_reduction <maximumf>, %8, %cst_4 [1] : vector<2x10xf32> to vector<2xf32>
    %10 = vector.shape_cast %9 : vector<2xf32> to vector<2x1xf32>
    %11 = tpu.iota {dimensions = array<i32: 1>} : vector<2x10xi32>
    %12 = arith.sitofp %11 : vector<2x10xi32> to vector<2x10xf32>
    %13 = vector.broadcast %10 : vector<2x1xf32> to vector<2x10xf32>
    %14 = arith.cmpf oeq, %8, %13 : vector<2x10xf32>
    %cst_5 = arith.constant 1.000000e+01 : f32
    %15 = vector.broadcast %cst_5 : f32 to vector<2x10xf32>
    %16 = arith.select %14, %12, %15 : vector<2x10xi1>, vector<2x10xf32>
    %cst_6 = arith.constant dense<0x7F800000> : vector<2xf32>
    %17 = vector.multi_reduction <minimumf>, %16, %cst_6 [1] : vector<2x10xf32> to vector<2xf32>
    %18 = vector.shape_cast %17 : vector<2xf32> to vector<2x1xf32>
    %19 = vector.broadcast %18 : vector<2x1xf32> to vector<2x10xf32>
    %20 = arith.cmpf oeq, %12, %19 : vector<2x10xf32>
    %21 = arith.extui %20 : vector<2x10xi1> to vector<2x10xi32>
    %22 = arith.sitofp %21 : vector<2x10xi32> to vector<2x10xf32>
    %c0_7 = arith.constant 0 : index
    %c0_8 = arith.constant 0 : index
    %23 = vector.load %arg3[%c0_7, %c0_8] : memref<10x160xf32, #tpu.memory_space<vmem>>, vector<10x160xf32>
    %cst_9 = arith.constant dense<0.000000e+00> : vector<2x160xf32>
    %24 = tpu.matmul %22, %23, %cst_9 {dimension_numbers = #tpu.dot_dimension_numbers<[1], [0], [0], [1], [0, 0, 1, 1], [], []>} : vector<2x10xf32>, vector<10x160xf32>, vector<2x160xf32> -> vector<2x160xf32>
    %cst_10 = arith.constant 5.000000e-01 : f32
    %25 = vector.broadcast %cst_10 : f32 to vector<2x160xf32>
    %26 = arith.cmpf ogt, %24, %25 : vector<2x160xf32>
    %cst_11 = arith.constant 0.000000e+00 : f32
    %27 = vector.broadcast %cst_11 : f32 to vector<2x160xf32>
    %28 = arith.select %26, %0, %27 : vector<2x160xi1>, vector<2x160xf32>
    %c0_12 = arith.constant 0 : index
    %c0_13 = arith.constant 0 : index
    %29 = vector.load %arg4[%c0_12, %c0_13] : memref<2x160xf32, #tpu.memory_space<vmem>>, vector<2x160xf32>
    tpu.vector_store %arg4[%c0_12, %c0_13], %28 {strides = array<i32>} : memref<2x160xf32, #tpu.memory_space<vmem>>, vector<2x160xf32>,
    return
  }
  func.func @transform_0(%arg0: i32) -> (i32, i32) {
    %c0_i32 = arith.constant 0 : i32
    %c0_i32_0 = arith.constant 0 : i32
    return %arg0, %c0_i32 : i32, i32
  }
  func.func @transform_1(%arg0: i32) -> (i32, i32) {
    %c0_i32 = arith.constant 0 : i32
    %c0_i32_0 = arith.constant 0 : i32
    %c0_i32_1 = arith.constant 0 : i32
    return %c0_i32, %c0_i32_0 : i32, i32
  }
  func.func @transform_2(%arg0: i32) -> (i32, i32) {
    %c0_i32 = arith.constant 0 : i32
    %c0_i32_0 = arith.constant 0 : i32
    %c0_i32_1 = arith.constant 0 : i32
    return %c0_i32, %c0_i32_0 : i32, i32
  }
  func.func @transform_3(%arg0: i32) -> (i32, i32) {
    %c0_i32 = arith.constant 0 : i32
    %c0_i32_0 = arith.constant 0 : i32
    return %arg0, %c0_i32 : i32, i32
  }
}

</mosaic_0001>

<llo_original>
// kernel: tpu_custom_call.1
$region0: #{tpu_custom_call.1}
  #allocation0 [shape = 'u32[]', space=smem, size = 0x4, offset = 0x4, fixed_abs, tag = 'smem constant byte address 0x4 - core index']
  #allocation1 [shape = 'u32[144,128]{1,0:T(1,128)}', space=vmem, size = 0x12000, scoped, tag = 'internal scratch']
  %s0 = inlined_call_operand.vmem [shape: f32[2,160], index: 0, kind: input, shape index: {}]
  %s1 = inlined_call_operand.vmem [shape: f32[160,10], index: 1, kind: input, shape index: {}]
  %s2 = inlined_call_operand.vmem [shape: f32[10,160], index: 2, kind: input, shape index: {}]
  %s3 = inlined_call_operand.hbm [shape: f32[2,160], index: 3, kind: output, shape index: {}]
  %s4 = sld [smem:[#allocation0]]
  $region22: #{tpu_custom_call.1} parent=0
    _
  %s6 = ssub.s32 1, %s4
  %s7 = scalar_select 0, %s6, %s4
  $region1: #{tpu_custom_call.1} parent=0
    #allocation2 [shape = 'u8[2048]{0}', space=vmem, size = 0x800, scoped, tag = 'output window, operand 0, single buffered']
    #allocation3 [shape = 's32[1]{0}', space=sflag, size = 0x4, scoped, tag = 'scoped memory for tpu_custom_call.1']
    %8 = vsyncpa [#allocation3], 0
    // Predicated region
    $region2: #{tpu_custom_call.1} parent=1 // pred_check
      _
    $region3: #{tpu_custom_call.1} parent=1 // pred_check_branch
      %10 = sbr.rel (0) target = $region5
    $region4: #{tpu_custom_call.1} parent=1 // pred_region
      _
    $region5: #{tpu_custom_call.1} parent=1 // pred_fallthru
      _
    // Predicated region
    $region6: #{tpu_custom_call.1} parent=1 // pred_check
      _
    $region7: #{tpu_custom_call.1} parent=1 // pred_check_branch
      %12 = sbr.rel (0) target = $region9
    $region8: #{tpu_custom_call.1} parent=1 // pred_region
      _
    $region9: #{tpu_custom_call.1} parent=1 // pred_fallthru
      _
    // Predicated region
    $region10: #{tpu_custom_call.1} parent=1 // pred_check
      _
    $region11: #{tpu_custom_call.1} parent=1 // pred_check_branch
      %14 = sbr.rel (0) target = $region13
    $region12: #{tpu_custom_call.1} parent=1 // pred_region
      _
    $region13: #{tpu_custom_call.1} parent=1 // pred_fallthru
      _
    %v15 = vld [vmem:[%s0] sm:$0xf]
    %v16 = vmul.f32 %v15, %v15
    %v19 = vunpack.c.l.s4 1983009808
    %v20 = vunpack.c.0.s8 %v19
    %v21 = vlaneseq
    %v22 = vshrl.u32 %v21, 7
    %v23 = vsub.s32 %v20, %v22
    %v24 = vrot.slane %v16, %v23
    %v25 = vcombine.high %v24, %v24
    %v28 = vpack.c.bf16 %v24, %v24
    %v29 = vpack.c.bf16 %v25, %v25
    %v30 = vunpack.c.l.bf16 %v28
    %v31 = vunpack.c.l.bf16 %v29
    %v34 = vcombine.low %v30, %v31
    %v36 = vunpack.c.l.s4 1983009808
    %v37 = vunpack.c.0.s8 %v36
    %v38 = vlaneseq
    %v39 = vshrl.u32 %v38, 7
    %v40 = vsub.s32 %v37, %v39
    %v41 = vrot.slane %v34, %v40
    %v43 = vsub.f32 %v16, %v41
    %v44 = vld [vmem:[%s1] sm:$0xff]
    %v45 = vld [vmem:[%s1 + $0x8] sm:$0xff]
    %v46 = vld [vmem:[%s1 + $0x10] sm:$0xff]
    %v47 = vld [vmem:[%s1 + $0x18] sm:$0xff]
    %v48 = vld [vmem:[%s1 + $0x20] sm:$0xff]
    %v49 = vld [vmem:[%s1 + $0x28] sm:$0xff]
    %v50 = vld [vmem:[%s1 + $0x30] sm:$0xff]
    %v51 = vld [vmem:[%s1 + $0x38] sm:$0xff]
    %v52 = vld [vmem:[%s1 + $0x40] sm:$0xff]
    %v53 = vld [vmem:[%s1 + $0x48] sm:$0xff]
    %v54 = vld [vmem:[%s1 + $0x50] sm:$0xff]
    %v55 = vld [vmem:[%s1 + $0x58] sm:$0xff]
    %v56 = vld [vmem:[%s1 + $0x60] sm:$0xff]
    %v57 = vld [vmem:[%s1 + $0x68] sm:$0xff]
    %v58 = vld [vmem:[%s1 + $0x70] sm:$0xff]
    %v59 = vld [vmem:[%s1 + $0x78] sm:$0xff]
    %v60 = vld [vmem:[%s1 + $0x80] sm:$0xff]
    %v61 = vld [vmem:[%s1 + $0x88] sm:$0xff]
    %v62 = vld [vmem:[%s1 + $0x90] sm:$0xff]
    %v63 = vld [vmem:[%s1 + $0x98] sm:$0xff]
    %v66 = vunpack.c.l.s4 1983009808
    %v67 = vunpack.c.0.s8 %v66
    %v68 = vlaneseq
    %v69 = vshrl.u32 %v68, 7
    %v70 = vsub.s32 %v67, %v69
    %v71 = vrot.slane %v43, %v70
    %v72 = vcombine.high %v71, %v71
    %vm74 = vcmask 261120
    %v75 = vsel %vm74, %v72, 0
    %77 = vmatprep.subr.mxu0 0.0
    %78 = vmatpush1.msra.mxu0 %v44
    %79 = vmatprep.subr.mxu0 0.0
    %80 = vmatpush1.msra.mxu0 %v45
    %81 = vmatprep.subr.mxu0 0.0
    %82 = vmatpush1.msra.mxu0 %v46
    %83 = vmatprep.subr.mxu0 0.0
    %84 = vmatpush1.msra.mxu0 %v47
    %85 = vmatprep.subr.mxu0 0.0
    %86 = vmatpush1.msra.mxu0 %v48
    %87 = vmatprep.subr.mxu0 0.0
    %88 = vmatpush1.msra.mxu0 %v49
    %89 = vmatprep.subr.mxu0 0.0
    %90 = vmatpush1.msra.mxu0 %v50
    %91 = vmatprep.subr.mxu0 0.0
    %92 = vmatpush1.msra.mxu0 %v51
    %93 = vmatprep.subr.mxu0 0.0
    %94 = vmatpush1.msra.mxu0 %v52
    %95 = vmatprep.subr.mxu0 0.0
    %96 = vmatpush1.msra.mxu0 %v53
    %97 = vmatprep.subr.mxu0 0.0
    %98 = vmatpush1.msra.mxu0 %v54
    %99 = vmatprep.subr.mxu0 0.0
    %100 = vmatpush1.msra.mxu0 %v55
    %101 = vmatprep.subr.mxu0 0.0
    %102 = vmatpush1.msra.mxu0 %v56
    %103 = vmatprep.subr.mxu0 0.0
    %104 = vmatpush1.msra.mxu0 %v57
    %105 = vmatprep.subr.mxu0 0.0
    %106 = vmatpush1.msra.mxu0 %v58
    %107 = vmatprep.subr.mxu0 0.0
    %108 = vmatpush1.msra.mxu0 %v59
    %109 = vmatprep.subr.mxu0 0.0
    %110 = vmatpush1.msra.mxu0 %v60
    %111 = vmatprep.subr.mxu0 0.0
    %112 = vmatpush1.msra.mxu0 %v61
    %113 = vmatprep.subr.mxu0 0.0
    %114 = vmatpush1.msra.mxu0 %v62
    %115 = vmatprep.subr.mxu0 0.0
    %116 = vmatpush1.msra.mxu0 %v63
    %117 = vmatprep.subr.mxu0 0.0
    %118 = vmatpush1.msra.mxu0 0.0
    %119 = vmatprep.subr.mxu0 0.0
    %120 = vmatpush1.msra.mxu0 0.0
    %121 = vmatprep.subr.mxu0 0.0
    %122 = vmatpush1.msra.mxu0 0.0
    %123 = vmatprep.subr.mxu0 0.0
    %124 = vmatpush1.msra.mxu0 0.0
    %125 = vmatprep.subr.mxu0 0.0
    %126 = vmatpush1.msra.mxu0 0.0
    %127 = vmatprep.subr.mxu0 0.0
    %128 = vmatpush1.msra.mxu0 0.0
    %129 = vmatprep.subr.mxu0 0.0
    %130 = vmatpush1.msra.mxu0 0.0
    %131 = vmatprep.subr.mxu0 0.0
    %132 = vmatpush1.msra.mxu0 0.0
    %133 = vmatprep.subr.mxu0 0.0
    %134 = vmatpush1.msra.mxu0 0.0
    %135 = vmatprep.subr.mxu0 0.0
    %136 = vmatpush1.msra.mxu0 0.0
    %137 = vmatprep.subr.mxu0 0.0
    %138 = vmatpush1.msra.mxu0 0.0
    %139 = vmatprep.subr.mxu0 0.0
    %140 = vmatpush1.msra.mxu0 0.0
    %141 = vmatprep.mubr.f32.mxu0 %v75
    %142 = vmatmul.mubr.f32.gmra.mrb[0].mxu0 %v71
    %v143 = vpop.f32.mrb[0].mxu0
    %v144 = vadd.f32 0.0, %v143
    %v145 = vpop.f32.mrb[0].mxu0
    %146 = vdwg.mxu0
    %v147 = vsel %vm74, %v31, 0
    %149 = vmatprep.subr.mxu0 0.0
    %150 = vmatpush1.msra.mxu0 %v44
    %151 = vmatprep.subr.mxu0 0.0
    %152 = vmatpush1.msra.mxu0 %v45
    %153 = vmatprep.subr.mxu0 0.0
    %154 = vmatpush1.msra.mxu0 %v46
    %155 = vmatprep.subr.mxu0 0.0
    %156 = vmatpush1.msra.mxu0 %v47
    %157 = vmatprep.subr.mxu0 0.0
    %158 = vmatpush1.msra.mxu0 %v48
    %159 = vmatprep.subr.mxu0 0.0
    %160 = vmatpush1.msra.mxu0 %v49
    %161 = vmatprep.subr.mxu0 0.0
    %162 = vmatpush1.msra.mxu0 %v50
    %163 = vmatprep.subr.mxu0 0.0
    %164 = vmatpush1.msra.mxu0 %v51
    %165 = vmatprep.subr.mxu0 0.0
    %166 = vmatpush1.msra.mxu0 %v52
    %167 = vmatprep.subr.mxu0 0.0
    %168 = vmatpush1.msra.mxu0 %v53
    %169 = vmatprep.subr.mxu0 0.0
    %170 = vmatpush1.msra.mxu0 %v54
    %171 = vmatprep.subr.mxu0 0.0
    %172 = vmatpush1.msra.mxu0 %v55
    %173 = vmatprep.subr.mxu0 0.0
    %174 = vmatpush1.msra.mxu0 %v56
    %175 = vmatprep.subr.mxu0 0.0
    %176 = vmatpush1.msra.mxu0 %v57
    %177 = vmatprep.subr.mxu0 0.0
    %178 = vmatpush1.msra.mxu0 %v58
    %179 = vmatprep.subr.mxu0 0.0
    %180 = vmatpush1.msra.mxu0 %v59
    %181 = vmatprep.subr.mxu0 0.0
    %182 = vmatpush1.msra.mxu0 %v60
    %183 = vmatprep.subr.mxu0 0.0
    %184 = vmatpush1.msra.mxu0 %v61
    %185 = vmatprep.subr.mxu0 0.0
    %186 = vmatpush1.msra.mxu0 %v62
    %187 = vmatprep.subr.mxu0 0.0
    %188 = vmatpush1.msra.mxu0 %v63
    %189 = vmatprep.subr.mxu0 0.0
    %190 = vmatpush1.msra.mxu0 0.0
    %191 = vmatprep.subr.mxu0 0.0
    %192 = vmatpush1.msra.mxu0 0.0
    %193 = vmatprep.subr.mxu0 0.0
    %194 = vmatpush1.msra.mxu0 0.0
    %195 = vmatprep.subr.mxu0 0.0
    %196 = vmatpush1.msra.mxu0 0.0
    %197 = vmatprep.subr.mxu0 0.0
    %198 = vmatpush1.msra.mxu0 0.0
    %199 = vmatprep.subr.mxu0 0.0
    %200 = vmatpush1.msra.mxu0 0.0
    %201 = vmatprep.subr.mxu0 0.0
    %202 = vmatpush1.msra.mxu0 0.0
    %203 = vmatprep.subr.mxu0 0.0
    %204 = vmatpush1.msra.mxu0 0.0
    %205 = vmatprep.subr.mxu0 0.0
    %206 = vmatpush1.msra.mxu0 0.0
    %207 = vmatprep.subr.mxu0 0.0
    %208 = vmatpush1.msra.mxu0 0.0
    %209 = vmatprep.subr.mxu0 0.0
    %210 = vmatpush1.msra.mxu0 0.0
    %211 = vmatprep.subr.mxu0 0.0
    %212 = vmatpush1.msra.mxu0 0.0
    %213 = vmatprep.mubr.f32.mxu0 %v147
    %214 = vmatmul.mubr.f32.gmra.mrb[0].mxu0 %v30
    %v215 = vpop.f32.mrb[0].mxu0
    %v216 = vadd.f32 %v144, %v215
    %v217 = vpop.f32.mrb[0].mxu0
    %218 = vdwg.mxu0
    %vm219 = vcmask 74752
    %v220 = vsel %vm219, %v216, -inf
    %221 = vmax.xlane.f32.xlu0 %v220
    %v222 = vpop.xlane.xlu0 %221
    %v223 = vlaneseq
    %v224 = vand.u32 %v223, 127
    %v225 = vcvt.s32.f32 %v224
    %vm226 = vcmp.eq.f32.partialorder %v216, %v222
    %v227 = vsel %vm226, %v225, 10.0
    %v228 = vsel %vm219, %v227, inf
    %229 = vmin.xlane.f32.xlu0 %v228
    %v230 = vpop.xlane.xlu0 %229
    %vm231 = vcmp.eq.f32.partialorder %v225, %v230
    %v232 = vsel %vm231, 1, 0
    %v233 = vcvt.s32.f32 %v232
    %v234 = vld [vmem:[%s2] sm:$0xff]
    %v235 = vld [vmem:[%s2 + $0x8] sm:$0xff]
    %v236 = vld [vmem:[%s2 + $0x10] sm:$0x3]
    %v237 = vld [vmem:[%s2 + $0x18] sm:$0x3]
    %vm238 = vcmask 80896
    %v240 = vsel %vm238, %v233, 0
    %vm242 = vcmask 1041408
    %v244 = vsel %vm242, %v236, 0
    %v247 = vsel %vm242, %v237, 0
    %249 = vmatprep.subr.mxu0 %v235
    %250 = vmatpush1.msra.mxu0 %v234
    %251 = vmatprep.subr.mxu0 %v247
    %252 = vmatpush1.msra.mxu0 %v244
    %253 = vmatprep.subr.mxu0 0.0
    %254 = vmatpush1.msra.mxu0 0.0
    %255 = vmatprep.subr.mxu0 0.0
    %256 = vmatpush1.msra.mxu0 0.0
    %257 = vmatprep.subr.mxu0 0.0
    %258 = vmatpush1.msra.mxu0 0.0
    %259 = vmatprep.subr.mxu0 0.0
    %260 = vmatpush1.msra.mxu0 0.0
    %261 = vmatprep.subr.mxu0 0.0
    %262 = vmatpush1.msra.mxu0 0.0
    %263 = vmatprep.subr.mxu0 0.0
    %264 = vmatpush1.msra.mxu0 0.0
    %265 = vmatprep.subr.mxu0 0.0
    %266 = vmatpush1.msra.mxu0 0.0
    %267 = vmatprep.subr.mxu0 0.0
    %268 = vmatpush1.msra.mxu0 0.0
    %269 = vmatprep.subr.mxu0 0.0
    %270 = vmatpush1.msra.mxu0 0.0
    %271 = vmatprep.subr.mxu0 0.0
    %272 = vmatpush1.msra.mxu0 0.0
    %273 = vmatprep.subr.mxu0 0.0
    %274 = vmatpush1.msra.mxu0 0.0
    %275 = vmatprep.subr.mxu0 0.0
    %276 = vmatpush1.msra.mxu0 0.0
    %277 = vmatprep.subr.mxu0 0.0
    %278 = vmatpush1.msra.mxu0 0.0
    %279 = vmatprep.subr.mxu0 0.0
    %280 = vmatpush1.msra.mxu0 0.0
    %281 = vmatprep.subr.mxu0 0.0
    %282 = vmatpush1.msra.mxu0 0.0
    %283 = vmatprep.subr.mxu0 0.0
    %284 = vmatpush1.msra.mxu0 0.0
    %285 = vmatprep.subr.mxu0 0.0
    %286 = vmatpush1.msra.mxu0 0.0
    %287 = vmatprep.subr.mxu0 0.0
    %288 = vmatpush1.msra.mxu0 0.0
    %289 = vmatprep.subr.mxu0 0.0
    %290 = vmatpush1.msra.mxu0 0.0
    %291 = vmatprep.subr.mxu0 0.0
    %292 = vmatpush1.msra.mxu0 0.0
    %293 = vmatprep.subr.mxu0 0.0
    %294 = vmatpush1.msra.mxu0 0.0
    %295 = vmatprep.subr.mxu0 0.0
    %296 = vmatpush1.msra.mxu0 0.0
    %297 = vmatprep.subr.mxu0 0.0
    %298 = vmatpush1.msra.mxu0 0.0
    %299 = vmatprep.subr.mxu0 0.0
    %300 = vmatpush1.msra.mxu0 0.0
    %301 = vmatprep.subr.mxu0 0.0
    %302 = vmatpush1.msra.mxu0 0.0
    %303 = vmatprep.subr.mxu0 0.0
    %304 = vmatpush1.msra.mxu0 0.0
    %305 = vmatprep.subr.mxu0 0.0
    %306 = vmatpush1.msra.mxu0 0.0
    %307 = vmatprep.subr.mxu0 0.0
    %308 = vmatpush1.msra.mxu0 0.0
    %309 = vmatprep.subr.mxu0 0.0
    %310 = vmatpush1.msra.mxu0 0.0
    %311 = vmatprep.subr.mxu0 0.0
    %312 = vmatpush1.msra.mxu0 0.0
    %313 = vmatprep.mubr.f32.mxu0 0.0
    %314 = vmatmul.mubr.f32.gmra.mrb[0].mxu0 %v240
    %v315 = vpop.f32.mrb[0].mxu0
    %v316 = vadd.f32 0.0, %v315
    %v317 = vpop.f32.mrb[0].mxu0
    %v318 = vadd.f32 0.0, %v317
    %319 = vdwg.mxu0
    %vm320 = vcmp.gt.f32.partialorder %v316, 0.5
    %vm321 = vcmp.gt.f32.partialorder %v318, 0.5
    %v324 = vunpack.c.l.s4 1983009808
    %v325 = vunpack.c.0.s8 %v324
    %v326 = vlaneseq
    %v327 = vshrl.u32 %v326, 7
    %v328 = vsub.s32 %v325, %v327
    %v329 = vrot.slane %v15, %v328
    %v330 = vcombine.high %v329, %v329
    %v333 = vsel %vm320, %v329, 0.0
    %v334 = vsel %vm321, %v330, 0.0
    %v337 = vcombine.low %v333, %v334
    %v339 = vunpack.c.l.s4 1983009808
    %v340 = vunpack.c.0.s8 %v339
    %v341 = vlaneseq
    %v342 = vshrl.u32 %v341, 7
    %v343 = vsub.s32 %v340, %v342
    %v344 = vrot.slane %v337, %v343
    %vm346 = vcmask 257026
    %vm347 = vmor %vm346, %vm242
    %348 = vst.msk [vmem:[#allocation2] sm:$0xf] %vm347, %v344
    // Predicated region
    $region14: #{tpu_custom_call.1} parent=1 // pred_check
      _
    $region15: #{tpu_custom_call.1} parent=1 // pred_check_branch
      %350 = sbr.rel (0) target = $region17
    $region16: #{tpu_custom_call.1} parent=1 // pred_region
      %s352 = ssub.s32 64, 64
      %353 = vsyncadd [#allocation3], %s352
      %s355 = sshll.u32 [#allocation2], 4
      %s356 = int_to_ptr.vmem [resolvable:$true] %s355
      %358 = dma.vmem_to_hbm [thread:$0]  %s356, 64, %s3, [#allocation3]
    $region17: #{tpu_custom_call.1} parent=1 // pred_fallthru
      _
    // Predicated region
    $region18: #{tpu_custom_call.1} parent=1 // pred_check
      _
    $region19: #{tpu_custom_call.1} parent=1 // pred_check_branch
      %360 = sbr.rel (0) target = $region21
    $region20: #{tpu_custom_call.1} parent=1 // pred_region
      %361 = dma.done [#allocation3], 64
    $region21: #{tpu_custom_call.1} parent=1 // pred_fallthru
      _
    %362 = vsyncpa [#allocation3], 1

</llo_original>
